<compile_context>
chip_gen: v6e
topology: v6e:2x2x1
jax: 0.10.0
libtpu: 0.0.40
codegen_flags: <defaults>
</compile_context>

<pallas_src>
from functools import partial

import jax
import jax.numpy as jnp
from jax.experimental import pallas as pl
from jax.experimental.pallas import tpu as pltpu

TOKEN_DIM = 768          # hard-coded in EmbeddingManager.__init__
PROJ_IN_DIM = 512        # nn.Linear(512, token_dim, bias=False)

_VMEM_TILE_BUDGET = 12 * 1024 * 1024   # 2 in-bufs + 2 out-bufs of the emb tile


def _round_up(x, k):
    return ((x + k - 1) // k) * k


def _embedding_manager_kernel(ph_tok_ref,    # SMEM scalar-prefetch: [P] int32 placeholder token ids
                              tok_ref,       # VMEM: [TM, 1] int32 tokenized text tile
                              emb_ref,       # VMEM: [TM, D] embedded text tile
                              ph_emb_ref,    # VMEM (whole array): [P, D] placeholder embeddings
                              out_ref,       # VMEM: [TM, D] output tile
                              *, num_placeholders):
    out = emb_ref[...]
    # P is tiny and static -> unrolled Python loop; all work is VPU elementwise.
    # TODO(synk): for large P a single one-hot MXU matmul pass would be better;
    # at P<=4 the kernel is HBM-bandwidth bound and this is optimal.
    for p in range(num_placeholders):
        mask = tok_ref[...] == ph_tok_ref[p]            # [TM, 1] bool
        ph_row = ph_emb_ref[p, :][None, :]              # [1, D]
        out = jnp.where(mask, ph_row, out)              # broadcast replace
    out_ref[...] = out


def embedding_manager_forward(reference_img,          # unused (matches PyTorch forward)
                              tokenized_text,         # [B, N] int
                              embedded_text,          # [B, N, D] float (dtype preserved)
                              placeholder_tokens,     # [P] int
                              placeholder_embeddings, # [P, D] (num_vectors_per_token == 1)
                              *, tile_rows=512):
    del reference_img
    b, n = tokenized_text.shape
    d = embedded_text.shape[-1]
    m = b * n

    out_dtype = embedded_text.dtype
    itemsize = jnp.dtype(out_dtype).itemsize
    # Sublane alignment: 8 rows for 4-byte, 16 for 2-byte, 32 for 1-byte dtypes.
    sublane = max(8, 32 // itemsize)

    # Clamp tile so the double-buffered (in + out) working set fits the most
    # conservative default scoped VMEM (v5e: 16 MiB; v6e/v7x: 32 MiB).
    max_tile = max(sublane, (_VMEM_TILE_BUDGET // (4 * d * itemsize)) // sublane * sublane)
    tile_rows = max(sublane, min(int(tile_rows), max_tile, _round_up(m, sublane)))
    tile_rows = _round_up(tile_rows, sublane)
    m_pad = _round_up(m, tile_rows)

    p_count = placeholder_tokens.shape[0]
    tokens_2d = tokenized_text.reshape(m, 1).astype(jnp.int32)
    emb_flat = embedded_text.reshape(m, d)
    ph_emb = placeholder_embeddings.astype(out_dtype)

    if m_pad != m:
        # Sentinel -1 never matches a (non-negative) CLIP token id; padded rows
        # are sliced off below anyway.
        tokens_2d = jnp.pad(tokens_2d, ((0, m_pad - m), (0, 0)), constant_values=-1)
        emb_flat = jnp.pad(emb_flat, ((0, m_pad - m), (0, 0)))

    kernel = partial(_embedding_manager_kernel, num_placeholders=p_count)

    out_flat = pl.pallas_call(
        kernel,
        out_shape=jax.ShapeDtypeStruct((m_pad, d), out_dtype),
        grid_spec=pltpu.PrefetchScalarGridSpec(
            num_scalar_prefetch=1,                     # placeholder token ids -> SMEM
            grid=(m_pad // tile_rows,),
            in_specs=[
                pl.BlockSpec((tile_rows, 1), lambda i, ph: (i, 0)),   # tokens tile
                pl.BlockSpec((tile_rows, d), lambda i, ph: (i, 0)),   # embedded text tile
                # invariant operand: keep whole array resident in VMEM, no re-blocking
                pl.BlockSpec(memory_space=pltpu.MemorySpace.VMEM),
            ],
            out_specs=pl.BlockSpec((tile_rows, d), lambda i, ph: (i, 0)),
        ),
        # Alias embedded-text input (flat index 2: [ph_tokens, tokens, emb, ph_emb])
        # onto the output -> no second M x D HBM allocation.
        input_output_aliases={2: 0},
        compiler_params=pltpu.CompilerParams(
            dimension_semantics=("parallel",)),
    )(placeholder_tokens.astype(jnp.int32), tokens_2d, emb_flat, ph_emb)

    return out_flat[:m].reshape(b, n, d)


def _init_params(key, num_placeholders, dtype=jnp.float32):
    """Deterministic stand-ins for what __init__ builds from the CLIP embedder."""
    k_emb, k_proj, _ = jax.random.split(key, 3)
    # string_to_param_dict values: [num_vectors_per_token=1, token_dim] per placeholder
    placeholder_embeddings = (0.02 * jax.random.normal(
        k_emb, (num_placeholders, TOKEN_DIM), dtype=jnp.float32)).astype(dtype)
    # Parameters declared in __init__ but NOT used by forward (kept for fidelity):
    # TODO(synk): projector / projector_norm exist in __init__ but are never used
    # by this forward(); initialized only for parameter parity.
    projector_w = 0.02 * jax.random.normal(
        k_proj, (TOKEN_DIM, PROJ_IN_DIM), dtype=jnp.float32)   # nn.Linear(512, 768, bias=False)
    bn_gamma = jnp.ones((TOKEN_DIM,), jnp.float32)             # nn.BatchNorm1d(768)
    bn_beta = jnp.zeros((TOKEN_DIM,), jnp.float32)
    return placeholder_embeddings, (projector_w, bn_gamma, bn_beta)


def _reference_forward(tokenized_text, embedded_text, placeholder_tokens, placeholder_embeddings):
    """Pure-JAX reference of the PyTorch forward."""
    ref = embedded_text
    for p in range(placeholder_tokens.shape[0]):
        mask = (tokenized_text == placeholder_tokens[p])[..., None]   # [B, N, 1]
        ref = jnp.where(mask, placeholder_embeddings[p][None, None, :], ref)
    return ref


if __name__ == "__main__":
    key = jax.random.PRNGKey(0)
    k_tok, k_embtxt, k_img, k_params = jax.random.split(key, 4)

    B, N, D = 2, 16, TOKEN_DIM
    P = 2                                   # two placeholder strings
    placeholder_tokens = jnp.array([265, 9126], dtype=jnp.int32)

    placeholder_embeddings, _unused_projector_params = _init_params(k_params, P)

    # Inputs
    tokenized_text = jax.random.randint(k_tok, (B, N), 1000, 40000, dtype=jnp.int32)
    # plant placeholder tokens so the replacement path is exercised
    tokenized_text = tokenized_text.at[0, 3].set(265)
    tokenized_text = tokenized_text.at[0, 10].set(9126)
    tokenized_text = tokenized_text.at[1, 7].set(265)

    embedded_text = jax.random.normal(k_embtxt, (B, N, D), dtype=jnp.float32)
    reference_img = jax.random.normal(k_img, (2, 3, 16, 16), dtype=jnp.float32)  # unused

    # --- float32 path ---
    out = embedding_manager_forward(
        reference_img, tokenized_text, embedded_text,
        placeholder_tokens, placeholder_embeddings)
    out = jax.block_until_ready(out)

    ref = _reference_forward(tokenized_text, embedded_text,
                             placeholder_tokens, placeholder_embeddings)
    assert out.shape == (B, N, D)
    assert out.dtype == embedded_text.dtype
    assert jnp.allclose(out, ref, atol=1e-6), "f32 mismatch vs reference"

    # --- bf16 path (dtype preserved end-to-end; select is exact) ---
    emb_bf16 = embedded_text.astype(jnp.bfloat16)
    ph_bf16 = placeholder_embeddings.astype(jnp.bfloat16)
    out_bf16 = embedding_manager_forward(
        reference_img, tokenized_text, emb_bf16,
        placeholder_tokens, ph_bf16)
    out_bf16 = jax.block_until_ready(out_bf16)

    ref_bf16 = _reference_forward(tokenized_text, emb_bf16, placeholder_tokens, ph_bf16)
    assert out_bf16.dtype == jnp.bfloat16
    assert jnp.array_equal(out_bf16, ref_bf16), "bf16 mismatch vs reference"

    print("KERNEL_OK")
</pallas_src>

<mosaic_0001>
module attributes {stable_mosaic.version = 11 : i64} {
  func.func @_embedding_manager_kernel(%arg0: i32, %arg1: memref<2xi32, #tpu.memory_space<smem>>, %arg2: memref<32x1xi32, #tpu.memory_space<vmem>>, %arg3: memref<32x768xf32, #tpu.memory_space<vmem>>, %arg4: memref<2x768xf32, #tpu.memory_space<vmem>>, %arg5: memref<32x768xf32, #tpu.memory_space<vmem>>) attributes {dimension_semantics = [#tpu.dimension_semantics<parallel>], iteration_bounds = array<i64: 1>, scalar_prefetch = 1 : i64, scratch_operands = 0 : i64, tpu.core_type = #tpu.core_type<tc>, window_params = [{transform_indices = @transform_0, window_bounds = array<i64: 32, 1>}, {transform_indices = @transform_1, window_bounds = array<i64: 32, 768>}, {pipeline_mode = #tpu.pipeline_mode<synchronous>, transform_indices = @transform_2, window_bounds = array<i64: 2, 768>}, {transform_indices = @transform_3, window_bounds = array<i64: 32, 768>}]} {
    %c0 = arith.constant 0 : index
    %c0_0 = arith.constant 0 : index
    %0 = vector.load %arg3[%c0, %c0_0] : memref<32x768xf32, #tpu.memory_space<vmem>>, vector<32x768xf32>
    %c0_1 = arith.constant 0 : index
    %c0_2 = arith.constant 0 : index
    %1 = vector.load %arg2[%c0_1, %c0_2] : memref<32x1xi32, #tpu.memory_space<vmem>>, vector<32x1xi32>
    %c0_3 = arith.constant 0 : index
    %2 = memref.load %arg1[%c0_3] : memref<2xi32, #tpu.memory_space<smem>>
    %3 = vector.broadcast %2 : i32 to vector<32x1xi32>
    %4 = arith.cmpi eq, %1, %3 : vector<32x1xi32>
    %c0_4 = arith.constant 0 : index
    %c0_5 = arith.constant 0 : index
    %5 = vector.load %arg4[%c0_4, %c0_5] : memref<2x768xf32, #tpu.memory_space<vmem>>, vector<1x768xf32>
    %6 = vector.shape_cast %5 : vector<1x768xf32> to vector<768xf32>
    %7 = vector.shape_cast %6 : vector<768xf32> to vector<1x768xf32>
    %8 = vector.shape_cast %4 : vector<32x1xi1> to vector<32x1xi1>
    %9 = vector.broadcast %8 : vector<32x1xi1> to vector<32x768xi1>
    %10 = vector.shape_cast %7 : vector<1x768xf32> to vector<1x768xf32>
    %11 = vector.broadcast %10 : vector<1x768xf32> to vector<32x768xf32>
    %12 = arith.select %9, %11, %0 : vector<32x768xi1>, vector<32x768xf32>
    %c0_6 = arith.constant 0 : index
    %c0_7 = arith.constant 0 : index
    %13 = vector.load %arg2[%c0_6, %c0_7] : memref<32x1xi32, #tpu.memory_space<vmem>>, vector<32x1xi32>
    %c1 = arith.constant 1 : index
    %14 = memref.load %arg1[%c1] : memref<2xi32, #tpu.memory_space<smem>>
    %15 = vector.broadcast %14 : i32 to vector<32x1xi32>
    %16 = arith.cmpi eq, %13, %15 : vector<32x1xi32>
    %c1_8 = arith.constant 1 : index
    %c0_9 = arith.constant 0 : index
    %17 = vector.load %arg4[%c1_8, %c0_9] : memref<2x768xf32, #tpu.memory_space<vmem>>, vector<1x768xf32>
    %18 = vector.shape_cast %17 : vector<1x768xf32> to vector<768xf32>
    %19 = vector.shape_cast %18 : vector<768xf32> to vector<1x768xf32>
    %20 = vector.shape_cast %16 : vector<32x1xi1> to vector<32x1xi1>
    %21 = vector.broadcast %20 : vector<32x1xi1> to vector<32x768xi1>
    %22 = vector.shape_cast %19 : vector<1x768xf32> to vector<1x768xf32>
    %23 = vector.broadcast %22 : vector<1x768xf32> to vector<32x768xf32>
    %24 = arith.select %21, %23, %12 : vector<32x768xi1>, vector<32x768xf32>
    %c0_10 = arith.constant 0 : index
    %c0_11 = arith.constant 0 : index
    %25 = vector.load %arg5[%c0_10, %c0_11] : memref<32x768xf32, #tpu.memory_space<vmem>>, vector<32x768xf32>
    tpu.vector_store %arg5[%c0_10, %c0_11], %24 {strides = array<i32>} : memref<32x768xf32, #tpu.memory_space<vmem>>, vector<32x768xf32>,
    return
  }
  func.func @transform_0(%arg0: i32, %arg1: memref<2xi32, #tpu.memory_space<smem>>) -> (i32, i32) {
    %c0_i32 = arith.constant 0 : i32
    %c0_i32_0 = arith.constant 0 : i32
    return %arg0, %c0_i32 : i32, i32
  }
  func.func @transform_1(%arg0: i32, %arg1: memref<2xi32, #tpu.memory_space<smem>>) -> (i32, i32) {
    %c0_i32 = arith.constant 0 : i32
    %c0_i32_0 = arith.constant 0 : i32
    return %arg0, %c0_i32 : i32, i32
  }
  func.func @transform_2(%arg0: i32, %arg1: memref<2xi32, #tpu.memory_space<smem>>) -> (i32, i32) {
    %c0_i32 = arith.constant 0 : i32
    %c0_i32_0 = arith.constant 0 : i32
    %c0_i32_1 = arith.constant 0 : i32
    return %c0_i32, %c0_i32_0 : i32, i32
  }
  func.func @transform_3(%arg0: i32, %arg1: memref<2xi32, #tpu.memory_space<smem>>) -> (i32, i32) {
    %c0_i32 = arith.constant 0 : i32
    %c0_i32_0 = arith.constant 0 : i32
    return %arg0, %c0_i32 : i32, i32
  }
}

</mosaic_0001>

<llo_original>
// kernel: tpu_custom_call.1
$region0: #{tpu_custom_call.1}
  #allocation0 [shape = 'u32[]', space=smem, size = 0x4, offset = 0x4, fixed_abs, tag = 'smem constant byte address 0x4 - core index']
  #allocation1 [shape = 'u32[144,128]{1,0:T(1,128)}', space=vmem, size = 0x12000, scoped, tag = 'internal scratch']
  #allocation2 [shape = 's32[1]{0}', space=sflag, size = 0x4, scoped, tag = 'scoped memory for tpu_custom_call.1']
  #allocation3 [shape = 'u8[512]{0}', space=smem, size = 0x200, scoped, tag = 'prefetched SMEM operand 0']
  %s0 = inlined_call_operand.vmem [shape: s32[2], index: 0, kind: input, shape index: {}]
  %s1 = inlined_call_operand.vmem [shape: s32[32,1], index: 1, kind: input, shape index: {}]
  %s2 = inlined_call_operand.hbm [shape: f32[32,768], index: 2, kind: input, shape index: {}, may-alias: {2,4}]
  %s3 = inlined_call_operand.vmem [shape: f32[2,768], index: 3, kind: input, shape index: {}]
  %s4 = inlined_call_operand.hbm [shape: f32[32,768], index: 4, kind: output, shape index: {}, may-alias: {2,4}]
  %s5 = sld [smem:[#allocation0]]
  $region26: #{tpu_custom_call.1} parent=0
    _
  %s7 = ssub.s32 1, %s5
  %s8 = scalar_select 0, %s7, %s5
  %s9 = sshll.u32 %s0, 4
  %s10 = int_to_ptr.vmem [resolvable:$true] %s9
  %12 = dma.vmem_to_smem %s10, 16, [#allocation3], [#allocation2]
  %13 = dma.done [#allocation2], 16
  %14 = sfence
  $region1: #{tpu_custom_call.1} parent=0
    #allocation4 [shape = 'u8[98304]{0}', space=vmem, size = 0x18000, scoped, tag = 'input window, operand 2, single buffered']
    #allocation5 [shape = 's32[1]{0}', space=sflag, size = 0x4, scoped, tag = 'scoped memory for tpu_custom_call.1']
    #allocation6 [shape = 's32[1]{0}', space=sflag, size = 0x4, scoped, tag = 'scoped memory for tpu_custom_call.1']
    #allocation7 [shape = 'u8[98304]{0}', space=vmem, size = 0x18000, scoped, tag = 'output window, operand 0, single buffered']
    %15 = vsyncpa [#allocation5], 0
    %16 = vsyncpa [#allocation6], 0
    // Predicated region
    $region2: #{tpu_custom_call.1} parent=1 // pred_check
      _
    $region3: #{tpu_custom_call.1} parent=1 // pred_check_branch
      %18 = sbr.rel (0) target = $region5
    $region4: #{tpu_custom_call.1} parent=1 // pred_region
      _
    $region5: #{tpu_custom_call.1} parent=1 // pred_fallthru
      _
    // Predicated region
    $region6: #{tpu_custom_call.1} parent=1 // pred_check
      _
    $region7: #{tpu_custom_call.1} parent=1 // pred_check_branch
      %20 = sbr.rel (0) target = $region9
    $region8: #{tpu_custom_call.1} parent=1 // pred_region
      %s22 = ssub.s32 3072, 3072
      %23 = vsyncadd [#allocation5], %s22
      %s24 = sshll.u32 [#allocation4], 4
      %s25 = int_to_ptr.vmem [resolvable:$true] %s24
      %30 = dma.hbm_to_vmem [thread:$0]  %s2, 3072, %s25, [#allocation5], 768, 768, 48
    $region9: #{tpu_custom_call.1} parent=1 // pred_fallthru
      _
    // Predicated region
    $region10: #{tpu_custom_call.1} parent=1 // pred_check
      _
    $region11: #{tpu_custom_call.1} parent=1 // pred_check_branch
      %32 = sbr.rel (0) target = $region13
    $region12: #{tpu_custom_call.1} parent=1 // pred_region
      _
    $region13: #{tpu_custom_call.1} parent=1 // pred_fallthru
      _
    // Predicated region
    $region14: #{tpu_custom_call.1} parent=1 // pred_check
      _
    $region15: #{tpu_custom_call.1} parent=1 // pred_check_branch
      %34 = sbr.rel (0) target = $region17
    $region16: #{tpu_custom_call.1} parent=1 // pred_region
      %35 = dma.done [#allocation5], 3072
    $region17: #{tpu_custom_call.1} parent=1 // pred_fallthru
      _
    %v36 = vld [vmem:[#allocation4] sm:$0xff]
    %v37 = vld [vmem:[#allocation4 + $0x8] sm:$0xff]
    %v38 = vld [vmem:[#allocation4 + $0x10] sm:$0xff]
    %v39 = vld [vmem:[#allocation4 + $0x18] sm:$0xff]
    %v40 = vld [vmem:[#allocation4 + $0x20] sm:$0xff]
    %v41 = vld [vmem:[#allocation4 + $0x28] sm:$0xff]
    %v42 = vld [vmem:[#allocation4 + $0x30] sm:$0xff]
    %v43 = vld [vmem:[#allocation4 + $0x38] sm:$0xff]
    %v44 = vld [vmem:[#allocation4 + $0x40] sm:$0xff]
    %v45 = vld [vmem:[#allocation4 + $0x48] sm:$0xff]
    %v46 = vld [vmem:[#allocation4 + $0x50] sm:$0xff]
    %v47 = vld [vmem:[#allocation4 + $0x58] sm:$0xff]
    %v48 = vld [vmem:[#allocation4 + $0x60] sm:$0xff]
    %v49 = vld [vmem:[#allocation4 + $0x68] sm:$0xff]
    %v50 = vld [vmem:[#allocation4 + $0x70] sm:$0xff]
    %v51 = vld [vmem:[#allocation4 + $0x78] sm:$0xff]
    %v52 = vld [vmem:[#allocation4 + $0x80] sm:$0xff]
    %v53 = vld [vmem:[#allocation4 + $0x88] sm:$0xff]
    %v54 = vld [vmem:[#allocation4 + $0x90] sm:$0xff]
    %v55 = vld [vmem:[#allocation4 + $0x98] sm:$0xff]
    %v56 = vld [vmem:[#allocation4 + $0xa0] sm:$0xff]
    %v57 = vld [vmem:[#allocation4 + $0xa8] sm:$0xff]
    %v58 = vld [vmem:[#allocation4 + $0xb0] sm:$0xff]
    %v59 = vld [vmem:[#allocation4 + $0xb8] sm:$0xff]
    %v60 = vld [vmem:[%s1] sm:$0xff]
    %v61 = vld [vmem:[%s1 + $0x8] sm:$0xff]
    %v62 = vld [vmem:[%s1 + $0x10] sm:$0xff]
    %v63 = vld [vmem:[%s1 + $0x18] sm:$0xff]
    %s64 = sld [smem:[#allocation3]]
    %v65 = vstv %s64
    %vm66 = vcmp.eq.s32.totalorder %v60, %v65
    %vm67 = vcmp.eq.s32.totalorder %v61, %v65
    %vm68 = vcmp.eq.s32.totalorder %v62, %v65
    %vm69 = vcmp.eq.s32.totalorder %v63, %v65
    %v70 = vld [vmem:[%s3] ss:$2 sm:$0x3f]
    %v71 = vsel %vm66, 1, 0
    %v72 = vsel %vm67, 1, 0
    %v73 = vsel %vm68, 1, 0
    %v74 = vsel %vm69, 1, 0
    %75 = vset.pattern.permute.xlu0 0
    %76 = vperm.xlu0 %75, %v71
    %v77 = vpop.permute.xlu0 %76
    %78 = vset.pattern.permute.xlu0 0
    %79 = vperm.xlu0 %78, %v72
    %v80 = vpop.permute.xlu0 %79
    %81 = vset.pattern.permute.xlu0 0
    %82 = vperm.xlu0 %81, %v73
    %v83 = vpop.permute.xlu0 %82
    %84 = vset.pattern.permute.xlu0 0
    %85 = vperm.xlu0 %84, %v74
    %v86 = vpop.permute.xlu0 %85
    %vm87 = vcmp.eq.s32.totalorder %v77, 1
    %vm88 = vcmp.eq.s32.totalorder %v80, 1
    %vm89 = vcmp.eq.s32.totalorder %v83, 1
    %vm90 = vcmp.eq.s32.totalorder %v86, 1
    %v92 = vlaneseq
    %v93 = vshrl.u32 %v92, 7
    %v94 = vsub.s32 0, %v93
    %v95 = vrot.slane %v70, %v94
    %v96 = vlaneseq
    %v97 = vshrl.u32 %v96, 7
    %v98 = vsub.s32 1, %v97
    %v99 = vrot.slane %v70, %v98
    %v100 = vlaneseq
    %v101 = vshrl.u32 %v100, 7
    %v102 = vsub.s32 2, %v101
    %v103 = vrot.slane %v70, %v102
    %v104 = vlaneseq
    %v105 = vshrl.u32 %v104, 7
    %v106 = vsub.s32 3, %v105
    %v107 = vrot.slane %v70, %v106
    %v108 = vlaneseq
    %v109 = vshrl.u32 %v108, 7
    %v110 = vsub.s32 4, %v109
    %v111 = vrot.slane %v70, %v110
    %v112 = vlaneseq
    %v113 = vshrl.u32 %v112, 7
    %v114 = vsub.s32 5, %v113
    %v115 = vrot.slane %v70, %v114
    %v122 = vsel %vm87, %v95, %v36
    %v123 = vsel %vm87, %v99, %v37
    %v124 = vsel %vm87, %v103, %v38
    %v125 = vsel %vm87, %v107, %v39
    %v126 = vsel %vm87, %v111, %v40
    %v127 = vsel %vm87, %v115, %v41
    %v128 = vsel %vm88, %v95, %v42
    %v129 = vsel %vm88, %v99, %v43
    %v130 = vsel %vm88, %v103, %v44
    %v131 = vsel %vm88, %v107, %v45
    %v132 = vsel %vm88, %v111, %v46
    %v133 = vsel %vm88, %v115, %v47
    %v134 = vsel %vm89, %v95, %v48
    %v135 = vsel %vm89, %v99, %v49
    %v136 = vsel %vm89, %v103, %v50
    %v137 = vsel %vm89, %v107, %v51
    %v138 = vsel %vm89, %v111, %v52
    %v139 = vsel %vm89, %v115, %v53
    %v140 = vsel %vm90, %v95, %v54
    %v141 = vsel %vm90, %v99, %v55
    %v142 = vsel %vm90, %v103, %v56
    %v143 = vsel %vm90, %v107, %v57
    %v144 = vsel %vm90, %v111, %v58
    %v145 = vsel %vm90, %v115, %v59
    %s146 = sld [smem:[#allocation3 + $0x1]]
    %v147 = vstv %s146
    %vm148 = vcmp.eq.s32.totalorder %v60, %v147
    %vm149 = vcmp.eq.s32.totalorder %v61, %v147
    %vm150 = vcmp.eq.s32.totalorder %v62, %v147
    %vm151 = vcmp.eq.s32.totalorder %v63, %v147
    %s152 = scalar_lea.vmem %s3, 1
    %v153 = vld [vmem:[%s152] ss:$2 sm:$0x3f]
    %v154 = vsel %vm148, 1, 0
    %v155 = vsel %vm149, 1, 0
    %v156 = vsel %vm150, 1, 0
    %v157 = vsel %vm151, 1, 0
    %158 = vset.pattern.permute.xlu0 0
    %159 = vperm.xlu0 %158, %v154
    %v160 = vpop.permute.xlu0 %159
    %161 = vset.pattern.permute.xlu0 0
    %162 = vperm.xlu0 %161, %v155
    %v163 = vpop.permute.xlu0 %162
    %164 = vset.pattern.permute.xlu0 0
    %165 = vperm.xlu0 %164, %v156
    %v166 = vpop.permute.xlu0 %165
    %167 = vset.pattern.permute.xlu0 0
    %168 = vperm.xlu0 %167, %v157
    %v169 = vpop.permute.xlu0 %168
    %vm170 = vcmp.eq.s32.totalorder %v160, 1
    %vm171 = vcmp.eq.s32.totalorder %v163, 1
    %vm172 = vcmp.eq.s32.totalorder %v166, 1
    %vm173 = vcmp.eq.s32.totalorder %v169, 1
    %v175 = vlaneseq
    %v176 = vshrl.u32 %v175, 7
    %v177 = vsub.s32 0, %v176
    %v178 = vrot.slane %v153, %v177
    %v179 = vlaneseq
    %v180 = vshrl.u32 %v179, 7
    %v181 = vsub.s32 1, %v180
    %v182 = vrot.slane %v153, %v181
    %v183 = vlaneseq
    %v184 = vshrl.u32 %v183, 7
    %v185 = vsub.s32 2, %v184
    %v186 = vrot.slane %v153, %v185
    %v187 = vlaneseq
    %v188 = vshrl.u32 %v187, 7
    %v189 = vsub.s32 3, %v188
    %v190 = vrot.slane %v153, %v189
    %v191 = vlaneseq
    %v192 = vshrl.u32 %v191, 7
    %v193 = vsub.s32 4, %v192
    %v194 = vrot.slane %v153, %v193
    %v195 = vlaneseq
    %v196 = vshrl.u32 %v195, 7
    %v197 = vsub.s32 5, %v196
    %v198 = vrot.slane %v153, %v197
    %v205 = vsel %vm170, %v178, %v122
    %v206 = vsel %vm170, %v182, %v123
    %v207 = vsel %vm170, %v186, %v124
    %v208 = vsel %vm170, %v190, %v125
    %v209 = vsel %vm170, %v194, %v126
    %v210 = vsel %vm170, %v198, %v127
    %v211 = vsel %vm171, %v178, %v128
    %v212 = vsel %vm171, %v182, %v129
    %v213 = vsel %vm171, %v186, %v130
    %v214 = vsel %vm171, %v190, %v131
    %v215 = vsel %vm171, %v194, %v132
    %v216 = vsel %vm171, %v198, %v133
    %v217 = vsel %vm172, %v178, %v134
    %v218 = vsel %vm172, %v182, %v135
    %v219 = vsel %vm172, %v186, %v136
    %v220 = vsel %vm172, %v190, %v137
    %v221 = vsel %vm172, %v194, %v138
    %v222 = vsel %vm172, %v198, %v139
    %v223 = vsel %vm173, %v178, %v140
    %v224 = vsel %vm173, %v182, %v141
    %v225 = vsel %vm173, %v186, %v142
    %v226 = vsel %vm173, %v190, %v143
    %v227 = vsel %vm173, %v194, %v144
    %v228 = vsel %vm173, %v198, %v145
    %229 = vst [vmem:[#allocation7] sm:$0xff] %v205
    %230 = vst [vmem:[#allocation7 + $0x8] sm:$0xff] %v206
    %231 = vst [vmem:[#allocation7 + $0x10] sm:$0xff] %v207
    %232 = vst [vmem:[#allocation7 + $0x18] sm:$0xff] %v208
    %233 = vst [vmem:[#allocation7 + $0x20] sm:$0xff] %v209
    %234 = vst [vmem:[#allocation7 + $0x28] sm:$0xff] %v210
    %235 = vst [vmem:[#allocation7 + $0x30] sm:$0xff] %v211
    %236 = vst [vmem:[#allocation7 + $0x38] sm:$0xff] %v212
    %237 = vst [vmem:[#allocation7 + $0x40] sm:$0xff] %v213
    %238 = vst [vmem:[#allocation7 + $0x48] sm:$0xff] %v214
    %239 = vst [vmem:[#allocation7 + $0x50] sm:$0xff] %v215
    %240 = vst [vmem:[#allocation7 + $0x58] sm:$0xff] %v216
    %241 = vst [vmem:[#allocation7 + $0x60] sm:$0xff] %v217
    %242 = vst [vmem:[#allocation7 + $0x68] sm:$0xff] %v218
    %243 = vst [vmem:[#allocation7 + $0x70] sm:$0xff] %v219
    %244 = vst [vmem:[#allocation7 + $0x78] sm:$0xff] %v220
    %245 = vst [vmem:[#allocation7 + $0x80] sm:$0xff] %v221
    %246 = vst [vmem:[#allocation7 + $0x88] sm:$0xff] %v222
    %247 = vst [vmem:[#allocation7 + $0x90] sm:$0xff] %v223
    %248 = vst [vmem:[#allocation7 + $0x98] sm:$0xff] %v224
    %249 = vst [vmem:[#allocation7 + $0xa0] sm:$0xff] %v225
    %250 = vst [vmem:[#allocation7 + $0xa8] sm:$0xff] %v226
    %251 = vst [vmem:[#allocation7 + $0xb0] sm:$0xff] %v227
    %252 = vst [vmem:[#allocation7 + $0xb8] sm:$0xff] %v228
    // Predicated region
    $region18: #{tpu_custom_call.1} parent=1 // pred_check
      _
    $region19: #{tpu_custom_call.1} parent=1 // pred_check_branch
      %254 = sbr.rel (0) target = $region21
    $region20: #{tpu_custom_call.1} parent=1 // pred_region
      %s256 = ssub.s32 3072, 3072
      %257 = vsyncadd [#allocation6], %s256
      %s258 = sshll.u32 [#allocation7], 4
      %s259 = int_to_ptr.vmem [resolvable:$true] %s258
      %264 = dma.vmem_to_hbm [thread:$0]  %s259, 3072, %s4, [#allocation6], 768, 768, 48
    $region21: #{tpu_custom_call.1} parent=1 // pred_fallthru
      _
    // Predicated region
    $region22: #{tpu_custom_call.1} parent=1 // pred_check
      _
    $region23: #{tpu_custom_call.1} parent=1 // pred_check_branch
      %266 = sbr.rel (0) target = $region25
    $region24: #{tpu_custom_call.1} parent=1 // pred_region
      %267 = dma.done [#allocation6], 3072
    $region25: #{tpu_custom_call.1} parent=1 // pred_fallthru
      _
    %268 = vsyncpa [#allocation5], 1
    %269 = vsyncpa [#allocation6], 1

</llo_original>
